<compile_context>
chip_gen: v5e
topology: v5e:2x2
jax: 0.10.0
libtpu: 0.0.40
codegen_flags: <defaults>
</compile_context>

<pallas_src>
import jax
import jax.numpy as jnp
from jax.experimental import pallas as pl
from jax.experimental.pallas import tpu as pltpu


_LANES = 128          # lane width: last dim of every VMEM block
_BLOCK_ROWS = 512     # (512,128) f32 = 256 KiB / array / buffer -> ~1.5 MiB pipelined


def _stats_kernel(x_ref, sums_ref):
    """Accumulate global sum and sum-of-squares (f32) into a (1, 2) SMEM output."""
    @pl.when(pl.program_id(0) == 0)
    def _():
        sums_ref[0, 0] = jnp.float32(0.0)
        sums_ref[0, 1] = jnp.float32(0.0)

    xf = x_ref[...].astype(jnp.float32)
    sums_ref[0, 0] += jnp.sum(xf)
    sums_ref[0, 1] += jnp.sum(xf * xf)


def _add_noise_kernel(scale_ref, x_ref, g_ref, o_ref):
    """out = x + |g| * scale, with the scalar scale broadcast from SMEM."""
    scale = scale_ref[0]                      # std * noise_factor (precomputed scalar)
    noise = jnp.abs(g_ref[...]) * scale       # one VPU mul per element
    o_ref[...] = (x_ref[...].astype(jnp.float32) + noise).astype(o_ref.dtype)


def gaussian_noise(x, key, noise_factor=0.05, training=True, block_rows=_BLOCK_ROWS):
    """Pallas implementation of GaussianNoise.forward (NCHW or any shape)."""
    if not training:
        return x

    orig_shape = x.shape
    total = x.size

    # Lane-dense flat view (rows, 128); zero-pad so rows is a multiple of the tile rows.
    rows = -(-total // _LANES)
    br = block_rows if rows >= block_rows else rows      # small tensors: one full block
    rows_pad = -(-rows // br) * br
    pad = rows_pad * _LANES - total

    x_flat = x.reshape(-1)
    if pad:
        x_flat = jnp.concatenate([x_flat, jnp.zeros((pad,), dtype=x.dtype)])
    x2 = x_flat.reshape(rows_pad, _LANES)

    num_tiles = rows_pad // br
    vmem_limit = 32 * 1024 * 1024  # explicit; fits v5e/v6e/v7x scoped VMEM comfortably

    # ---- Pass 1: single-read sum / sum-of-squares (zero padding contributes nothing).
    sums = pl.pallas_call(
        _stats_kernel,
        out_shape=jax.ShapeDtypeStruct((1, 2), jnp.float32),
        grid=(num_tiles,),
        in_specs=[pl.BlockSpec((br, _LANES), lambda i: (i, 0))],
        out_specs=pl.BlockSpec(memory_space=pltpu.MemorySpace.SMEM),
        compiler_params=pltpu.CompilerParams(
            dimension_semantics=("arbitrary",),   # resident accumulator across the grid
            vmem_limit_bytes=vmem_limit,
        ),
    )(x2)

    # Unbiased variance (torch.std default, correction=1) from the single-pass stats.
    n = jnp.float32(total)
    s, ss = sums[0, 0], sums[0, 1]
    var = jnp.maximum(ss - s * s / n, 0.0) / jnp.maximum(n - 1.0, 1.0)
    std = jnp.sqrt(var)
    scale = (std * jnp.float32(noise_factor)).reshape(1)   # scalar folded once

    # Standard-normal draw (same padded flat layout), generated outside the kernel.
    g2 = jax.random.normal(key, (rows_pad, _LANES), dtype=jnp.float32)

    # ---- Pass 2: tiled elementwise  out = x + |g| * scale.
    out2 = pl.pallas_call(
        _add_noise_kernel,
        out_shape=jax.ShapeDtypeStruct((rows_pad, _LANES), x.dtype),
        grid=(num_tiles,),
        in_specs=[
            pl.BlockSpec(memory_space=pltpu.MemorySpace.SMEM),   # scale scalar
            pl.BlockSpec((br, _LANES), lambda i: (i, 0)),        # x tile
            pl.BlockSpec((br, _LANES), lambda i: (i, 0)),        # gaussian tile
        ],
        out_specs=pl.BlockSpec((br, _LANES), lambda i: (i, 0)),
        compiler_params=pltpu.CompilerParams(
            dimension_semantics=("parallel",),    # shard across TCs (v7x megacore)
            vmem_limit_bytes=vmem_limit,
        ),
    )(scale, x2, g2)

    out_flat = out2.reshape(-1)
    if pad:
        out_flat = out_flat[:total]
    return out_flat.reshape(orig_shape)


if __name__ == "__main__":
    key = jax.random.PRNGKey(0)
    kx, kn = jax.random.split(key)

    # NCHW input, small shapes: batch=2, channels=4, spatial=16x16
    x = jax.random.normal(kx, (2, 4, 16, 16), dtype=jnp.float32)

    y = gaussian_noise(x, kn, noise_factor=0.05, training=True)
    y = jax.block_until_ready(y)

    assert y.shape == x.shape and y.dtype == x.dtype

    # Noise is non-negative (abs) and bounded in magnitude.
    diff = y - x
    assert bool(jnp.all(diff >= 0.0))
    std_ref = jnp.std(x, ddof=1)
    assert bool(jnp.max(diff) <= 10.0 * std_ref * 0.05 + 1e-6)

    # Full numerical reference (same flat layout / key as the wrapper uses;
    # no padding needed at this size: 2048 elements = 16 x 128).
    g_ref = jax.random.normal(kn, (16, _LANES), dtype=jnp.float32).reshape(x.shape)
    expected = x + jnp.abs(g_ref) * std_ref * 0.05
    assert bool(jnp.allclose(y, expected, rtol=1e-4, atol=1e-5))

    # Eval mode is identity.
    y_eval = gaussian_noise(x, kn, training=False)
    assert bool(jnp.all(y_eval == x))

    print("KERNEL_OK")
</pallas_src>

<mosaic_0001>
module attributes {stable_mosaic.version = 11 : i64} {
  func.func @_stats_kernel(%arg0: i32, %arg1: memref<16x128xf32, #tpu.memory_space<vmem>>, %arg2: memref<1x2xf32, #tpu.memory_space<smem>>) attributes {dimension_semantics = [#tpu.dimension_semantics<arbitrary>], iteration_bounds = array<i64: 1>, scalar_prefetch = 0 : i64, scratch_operands = 0 : i64, tpu.core_type = #tpu.core_type<tc>, window_params = [{transform_indices = @transform_0, window_bounds = array<i64: 16, 128>}, {transform_indices = @transform_1, window_bounds = array<i64: 1, 2>}]} {
    %c0_i32 = arith.constant 0 : i32
    %0 = arith.cmpi eq, %arg0, %c0_i32 : i32
    %1 = arith.extui %0 : i1 to i32
    %c0_i32_0 = arith.constant 0 : i32
    %2 = arith.cmpi ne, %1, %c0_i32_0 : i32
    scf.if %2 {
      %cst_10 = arith.constant 0.000000e+00 : f32
      %c0_11 = arith.constant 0 : index
      %c0_12 = arith.constant 0 : index
      %19 = memref.load %arg2[%c0_11, %c0_12] : memref<1x2xf32, #tpu.memory_space<smem>>
      memref.store %cst_10, %arg2[%c0_11, %c0_12] : memref<1x2xf32, #tpu.memory_space<smem>>
      %cst_13 = arith.constant 0.000000e+00 : f32
      %c0_14 = arith.constant 0 : index
      %c1_15 = arith.constant 1 : index
      %20 = memref.load %arg2[%c0_14, %c1_15] : memref<1x2xf32, #tpu.memory_space<smem>>
      memref.store %cst_13, %arg2[%c0_14, %c1_15] : memref<1x2xf32, #tpu.memory_space<smem>>
    } else {
    }
    %c0 = arith.constant 0 : index
    %c0_1 = arith.constant 0 : index
    %3 = vector.load %arg1[%c0, %c0_1] : memref<16x128xf32, #tpu.memory_space<vmem>>, vector<16x128xf32>
    %c0_2 = arith.constant 0 : index
    %c0_3 = arith.constant 0 : index
    %4 = memref.load %arg2[%c0_2, %c0_3] : memref<1x2xf32, #tpu.memory_space<smem>>
    %5 = vector.shape_cast %3 : vector<16x128xf32> to vector<1x16x128xf32>
    %cst = arith.constant dense<0.000000e+00> : vector<1xf32>
    %6 = vector.multi_reduction <add>, %5, %cst [1, 2] : vector<1x16x128xf32> to vector<1xf32>
    %7 = vector.shape_cast %6 : vector<1xf32> to vector<1x1x1xf32>
    %8 = vector.extract %7[0, 0, 0] : f32 from vector<1x1x1xf32>
    %9 = arith.addf %4, %8 : f32
    %c0_4 = arith.constant 0 : index
    %c0_5 = arith.constant 0 : index
    %10 = memref.load %arg2[%c0_4, %c0_5] : memref<1x2xf32, #tpu.memory_space<smem>>
    memref.store %9, %arg2[%c0_4, %c0_5] : memref<1x2xf32, #tpu.memory_space<smem>>
    %c0_6 = arith.constant 0 : index
    %c1 = arith.constant 1 : index
    %11 = memref.load %arg2[%c0_6, %c1] : memref<1x2xf32, #tpu.memory_space<smem>>
    %12 = arith.mulf %3, %3 : vector<16x128xf32>
    %13 = vector.shape_cast %12 : vector<16x128xf32> to vector<1x16x128xf32>
    %cst_7 = arith.constant dense<0.000000e+00> : vector<1xf32>
    %14 = vector.multi_reduction <add>, %13, %cst_7 [1, 2] : vector<1x16x128xf32> to vector<1xf32>
    %15 = vector.shape_cast %14 : vector<1xf32> to vector<1x1x1xf32>
    %16 = vector.extract %15[0, 0, 0] : f32 from vector<1x1x1xf32>
    %17 = arith.addf %11, %16 : f32
    %c0_8 = arith.constant 0 : index
    %c1_9 = arith.constant 1 : index
    %18 = memref.load %arg2[%c0_8, %c1_9] : memref<1x2xf32, #tpu.memory_space<smem>>
    memref.store %17, %arg2[%c0_8, %c1_9] : memref<1x2xf32, #tpu.memory_space<smem>>
    return
  }
  func.func @transform_0(%arg0: i32) -> (i32, i32) {
    %c0_i32 = arith.constant 0 : i32
    %c0_i32_0 = arith.constant 0 : i32
    return %arg0, %c0_i32 : i32, i32
  }
  func.func @transform_1(%arg0: i32) -> (i32, i32) {
    %c0_i32 = arith.constant 0 : i32
    %c0_i32_0 = arith.constant 0 : i32
    %c0_i32_1 = arith.constant 0 : i32
    return %c0_i32, %c0_i32_0 : i32, i32
  }
}

</mosaic_0001>

<llo_original>
// kernel: tpu_custom_call.1
$region0: #{tpu_custom_call.1}
  #allocation0 [shape = 'u32[]', space=smem, size = 0x4, offset = 0x4, fixed_abs, tag = 'smem constant byte address 0x4 - core index']
  #allocation1 [shape = 'u32[72,128]{1,0:T(1,128)}', space=vmem, size = 0x9000, scoped, tag = 'internal scratch']
  %s0 = inlined_call_operand.hbm [shape: f32[16,128], index: 0, kind: input, shape index: {}]
  %s1 = inlined_call_operand.hbm [shape: f32[1,2], index: 1, kind: output, shape index: {}]
  %s2 = sld [smem:[#allocation0]]
  $region22: #{tpu_custom_call.1} parent=0
    _
  %s4 = ssub.s32 1, %s2
  %s5 = scalar_select 0, %s4, %s2
  $region1: #{tpu_custom_call.1} parent=0
    #allocation2 [shape = 'u8[8192]{0}', space=vmem, size = 0x2000, scoped, tag = 'input window, operand 0, single buffered']
    #allocation3 [shape = 's32[1]{0}', space=sflag, size = 0x4, scoped, tag = 'scoped memory for tpu_custom_call.1']
    #allocation4 [shape = 's32[1]{0}', space=sflag, size = 0x4, scoped, tag = 'scoped memory for tpu_custom_call.1']
    #allocation5 [shape = 'u8[512]{0}', space=smem, size = 0x200, scoped, tag = 'output window, operand 0, single buffered']
    %6 = vsyncpa [#allocation3], 0
    %7 = vsyncpa [#allocation4], 0
    // Predicated region
    $region2: #{tpu_custom_call.1} parent=1 // pred_check
      _
    $region3: #{tpu_custom_call.1} parent=1 // pred_check_branch
      %9 = sbr.rel (0) target = $region5
    $region4: #{tpu_custom_call.1} parent=1 // pred_region
      %11 = vsyncadd [#allocation3], 0
      %s12 = sshll.u32 %s0, 4
      %s13 = int_to_ptr.hbm [resolvable:$true] %s12
      %s14 = sshll.u32 [#allocation2], 4
      %s15 = int_to_ptr.vmem [resolvable:$true] %s14
      %20 = dma.hbm_to_vmem [thread:$0]  %s13, 256, %s15, [#allocation3], 128, 128, 8
    $region5: #{tpu_custom_call.1} parent=1 // pred_fallthru
      _
    // Predicated region
    $region6: #{tpu_custom_call.1} parent=1 // pred_check
      _
    $region7: #{tpu_custom_call.1} parent=1 // pred_check_branch
      %22 = sbr.rel (0) target = $region9
    $region8: #{tpu_custom_call.1} parent=1 // pred_region
      %24 = dma.done [#allocation3], 256
    $region9: #{tpu_custom_call.1} parent=1 // pred_fallthru
      _
    %p25 = scmp.eq.s32.totalorder 0, 0
    // Predicated region
    $region10: #{tpu_custom_call.1} parent=1 // pred_check
      %p26 = pneg %p25
    $region11: #{tpu_custom_call.1} parent=1 // pred_check_branch
      %28 = sbr.rel (%p26) target = $region13
    $region12: #{tpu_custom_call.1} parent=1 // pred_region
      %s29 = scalar_lea.smem [#allocation5], 0
      %30 = sst [smem:[%s29]] 0.0
      %s31 = scalar_lea.smem [#allocation5], 1
      %32 = sst [smem:[%s31]] 0.0
    $region13: #{tpu_custom_call.1} parent=1 // pred_fallthru
      _
    %v33 = vld [vmem:[#allocation2] sm:$0xff]
    %v34 = vld [vmem:[#allocation2 + $0x8] sm:$0xff]
    %s35 = sld [smem:[#allocation5]]
    %v36 = vadd.f32 %v33, %v34
    %37 = vadd.xlane.f32.xlu0 %v36
    %v38 = vpop.xlane.xlu0 %37
    %v39 = vrot.slane %v38, 4
    %v40 = vadd.f32 %v38, %v39
    %v41 = vrot.slane %v40, 2
    %v42 = vadd.f32 %v40, %v41
    %v43 = vrot.slane %v42, 1
    %v44 = vadd.f32 %v42, %v43
    %s45 = vtos %v44
    %s46 = sadd.f32 %s35, %s45
    %s47 = scalar_lea.smem [#allocation5], 0
    %48 = sst [smem:[%s47]] %s46
    %s49 = sld [smem:[#allocation5 + $0x1]]
    %v50 = vmul.f32 %v33, %v33
    %v51 = vmul.f32 %v34, %v34
    %v52 = vadd.f32 %v50, %v51
    %53 = vadd.xlane.f32.xlu0 %v52
    %v54 = vpop.xlane.xlu0 %53
    %v55 = vrot.slane %v54, 4
    %v56 = vadd.f32 %v54, %v55
    %v57 = vrot.slane %v56, 2
    %v58 = vadd.f32 %v56, %v57
    %v59 = vrot.slane %v58, 1
    %v60 = vadd.f32 %v58, %v59
    %s61 = vtos %v60
    %s62 = sadd.f32 %s49, %s61
    %s63 = scalar_lea.smem [#allocation5], 1
    %64 = sst [smem:[%s63]] %s62
    // Predicated region
    $region14: #{tpu_custom_call.1} parent=1 // pred_check
      _
    $region15: #{tpu_custom_call.1} parent=1 // pred_check_branch
      %66 = sbr.rel (0) target = $region17
    $region16: #{tpu_custom_call.1} parent=1 // pred_region
      %68 = vsyncadd [#allocation4], 0
      %s70 = sshll.u32 %s1, 4
      %s71 = int_to_ptr.hbm [resolvable:$true] %s70
      %73 = dma.smem_to_hbm [#allocation5], 16, %s71, [#allocation4]
    $region17: #{tpu_custom_call.1} parent=1 // pred_fallthru
      _
    // Predicated region
    $region18: #{tpu_custom_call.1} parent=1 // pred_check
      _
    $region19: #{tpu_custom_call.1} parent=1 // pred_check_branch
      %75 = sbr.rel (0) target = $region21
    $region20: #{tpu_custom_call.1} parent=1 // pred_region
      %77 = dma.done [#allocation4], 16
    $region21: #{tpu_custom_call.1} parent=1 // pred_fallthru
      _
    %78 = sfence
    %79 = vsyncpa [#allocation3], 1
    %80 = vsyncpa [#allocation4], 1

</llo_original>
